<compile_context>
chip_gen: v7x
topology: tpu7x:2x2x1
jax: 0.10.0
libtpu: 0.0.40
codegen_flags: <defaults>
</compile_context>

<pallas_src>
import functools

import jax
import jax.numpy as jnp
from jax.experimental import pallas as pl
from jax.experimental.pallas import tpu as pltpu

_TILE_ROWS_PACKED = 2048     # 2048 x 128 x 4 B = 1 MiB (f32) per input block
_TILE_BYTES_ROWS = 1 << 20   # ~1 MiB per block for the generic (N, C) path


def _power_term(d, m):
    """|d| ** m, keeping integer powers on the VPU (lax.integer_pow)."""
    if m == 1:
        return jnp.abs(d)
    if isinstance(m, int) and m % 2 == 0:
        return d ** m                  # even power: |d|**m == d**m, skip abs
    return jnp.abs(d) ** m


# ----------------------------------------------------------------------------
# Lane-packed path:  (N, C) viewed as (P, 128) with P = N*C/128, 128 % C == 0.
# hot[p, s] = lane index (in [0, 128)) of the +1 entry for packed sub-row s.
# ----------------------------------------------------------------------------
def _spe_loss_packed_kernel(x_ref, hot_ref, out_ref, *, m, beta,
                            valid_rows, mask_rows):
    # x_ref:   (TILE_P, 128) input dtype   hot_ref: (TILE_P, R) int32
    # out_ref: (1, 1, 128)   f32 per-tile lane partial sums
    x = jnp.tanh(beta * x_ref[...].astype(jnp.float32))
    tp, lanes = x.shape
    lane = jax.lax.broadcasted_iota(jnp.int32, (tp, lanes), 1)

    # Rebuild the one-hot: OR over the R packed sub-rows (R static, small).
    onehot = jnp.zeros((tp, lanes), dtype=jnp.bool_)
    r = hot_ref.shape[1]
    for s in range(r):
        onehot = onehot | (lane == hot_ref[:, s:s + 1])
    tgt = jnp.where(onehot, 1.0, -1.0)

    contrib = _power_term(x - tgt, m)
    if mask_rows:  # last grid tile may extend past the real data
        grow = pl.program_id(0) * tp + jax.lax.broadcasted_iota(
            jnp.int32, (tp, lanes), 0)
        contrib = jnp.where(grow < valid_rows, contrib, 0.0)

    # Only a sublane-axis partial reduce per tile; lane-dense (1,1,128) store.
    out_ref[...] = jnp.sum(contrib, axis=0, keepdims=True).reshape(1, 1, lanes)


def _spe_loss_packed(output, target, m, beta):
    n, c = output.shape
    r = 128 // c
    p = (n * c) // 128

    rows = jnp.arange(n, dtype=jnp.int32)
    hot = (target + (rows % r) * c).reshape(p, r)      # (P, R) int32, tiny
    x2 = output.reshape(p, 128)                        # contiguous, free view

    tile_p = p if p <= _TILE_ROWS_PACKED else _TILE_ROWS_PACKED
    g = pl.cdiv(p, tile_p)
    mask_rows = (g * tile_p) != p

    kernel = functools.partial(_spe_loss_packed_kernel, m=m, beta=beta,
                               valid_rows=p, mask_rows=mask_rows)
    partials = pl.pallas_call(
        kernel,
        out_shape=jax.ShapeDtypeStruct((g, 1, 128), jnp.float32),
        grid=(g,),
        in_specs=[
            pl.BlockSpec((tile_p, 128), lambda i: (i, 0)),
            pl.BlockSpec((tile_p, r), lambda i: (i, 0)),
        ],
        out_specs=pl.BlockSpec((1, 1, 128), lambda i: (i, 0, 0)),
        compiler_params=pltpu.CompilerParams(
            dimension_semantics=("parallel",)),
    )(x2, hot)
    return jnp.sum(partials)


# ----------------------------------------------------------------------------
# Generic fallback path: keep (N, C) layout, tile over the batch dim.
# ----------------------------------------------------------------------------
def _spe_loss_rows_kernel(x_ref, tgt_ref, out_ref, *, m, beta,
                          valid_rows, mask_rows):
    # x_ref: (TILE_N, C) input dtype, tgt_ref: (TILE_N, 1) int32
    # out_ref: (1, 1, 1) f32 per-tile partial sum
    x = jnp.tanh(beta * x_ref[...].astype(jnp.float32))
    tn, c = x.shape
    col = jax.lax.broadcasted_iota(jnp.int32, (tn, c), 1)
    tgt = jnp.where(col == tgt_ref[...], 1.0, -1.0)

    contrib = _power_term(x - tgt, m)
    if mask_rows:
        row = pl.program_id(0) * tn + jax.lax.broadcasted_iota(
            jnp.int32, (tn, c), 0)
        contrib = jnp.where(row < valid_rows, contrib, 0.0)

    out_ref[0, 0, 0] = jnp.sum(contrib)


def _spe_loss_rows(output, target, m, beta):
    n, c = output.shape
    itemsize = jnp.dtype(output.dtype).itemsize
    # ~1 MiB input blocks (double-buffered well inside every scoped VMEM cap).
    # TODO(synk): for extremely wide C (> ~64K f32 columns) even an 8-row
    # block exceeds ~1 MiB; a column-tiled variant would be needed there.
    target_rows = max(8, _TILE_BYTES_ROWS // max(1, c * itemsize))
    tile_n = n if n <= target_rows else (target_rows // 8) * 8
    g = pl.cdiv(n, tile_n)
    mask_rows = (g * tile_n) != n

    tgt2 = target.reshape(n, 1)
    kernel = functools.partial(_spe_loss_rows_kernel, m=m, beta=beta,
                               valid_rows=n, mask_rows=mask_rows)
    partials = pl.pallas_call(
        kernel,
        out_shape=jax.ShapeDtypeStruct((g, 1, 1), jnp.float32),
        grid=(g,),
        in_specs=[
            pl.BlockSpec((tile_n, c), lambda i: (i, 0)),
            pl.BlockSpec((tile_n, 1), lambda i: (i, 0)),
        ],
        out_specs=pl.BlockSpec((1, 1, 1), lambda i: (i, 0, 0)),
        compiler_params=pltpu.CompilerParams(
            dimension_semantics=("parallel",)),
    )(output, tgt2)
    return jnp.sum(partials)


def spe_loss(output, target, m=1, beta=0.1):
    """output: (N, C) float (any precision), target: (N,) int labels.

    Returns the scalar SPE loss in float32.
    """
    n, c = output.shape
    if isinstance(m, float) and m.is_integer():
        m = int(m)                     # keep pow on the VPU (integer_pow)
    target = target.astype(jnp.int32)

    if 128 % c == 0 and n % (128 // c) == 0:
        return _spe_loss_packed(output, target, m, beta)
    return _spe_loss_rows(output, target, m, beta)


def spe_loss_ref(output, target, m=1, beta=0.1):
    """Plain-JAX reference mirroring the PyTorch module."""
    out = jnp.tanh(beta * output.astype(jnp.float32))
    tgt = jax.nn.one_hot(target, out.shape[1], dtype=jnp.float32) * 2.0 - 1.0
    return jnp.sum(jnp.abs(out - tgt) ** m)


if __name__ == "__main__":
    key = jax.random.PRNGKey(0)
    k1, k2, k3 = jax.random.split(key, 3)

    N, C = 8, 16  # batch=8, num_classes=16
    output = jax.random.normal(k1, (N, C), dtype=jnp.float32) * 3.0
    target = jax.random.randint(k2, (N,), 0, C, dtype=jnp.int32)

    # Lane-packed path, f32, m=1.
    loss = jax.block_until_ready(spe_loss(output, target, m=1, beta=0.1))
    ref = spe_loss_ref(output, target, m=1, beta=0.1)
    assert jnp.allclose(loss, ref, rtol=1e-5, atol=1e-5), (loss, ref)

    # Lane-packed path, bf16 input (cast happens in-kernel), even m=2.
    out_bf16 = output.astype(jnp.bfloat16)
    loss2 = jax.block_until_ready(spe_loss(out_bf16, target, m=2, beta=0.1))
    ref2 = spe_loss_ref(out_bf16, target, m=2, beta=0.1)
    assert jnp.allclose(loss2, ref2, rtol=1e-4, atol=1e-4), (loss2, ref2)

    # Generic fallback path (C does not divide 128).
    Cg = 10
    out_g = jax.random.normal(k3, (N, Cg), dtype=jnp.float32) * 3.0
    tgt_g = jax.random.randint(k2, (N,), 0, Cg, dtype=jnp.int32)
    loss3 = jax.block_until_ready(spe_loss(out_g, tgt_g, m=1, beta=0.1))
    ref3 = spe_loss_ref(out_g, tgt_g, m=1, beta=0.1)
    assert jnp.allclose(loss3, ref3, rtol=1e-5, atol=1e-5), (loss3, ref3)

    print("KERNEL_OK")
</pallas_src>

<mosaic_0001>
module attributes {stable_mosaic.version = 11 : i64} {
  func.func @_spe_loss_packed_kernel(%arg0: i32, %arg1: memref<1x128xf32, #tpu.memory_space<vmem>>, %arg2: memref<1x8xi32, #tpu.memory_space<vmem>>, %arg3: memref<1x1x128xf32, #tpu.memory_space<vmem>>) attributes {dimension_semantics = [#tpu.dimension_semantics<parallel>], iteration_bounds = array<i64: 1>, scalar_prefetch = 0 : i64, scratch_operands = 0 : i64, tpu.core_type = #tpu.core_type<tc>, window_params = [{transform_indices = @transform_0, window_bounds = array<i64: 1, 128>}, {transform_indices = @transform_1, window_bounds = array<i64: 1, 8>}, {transform_indices = @transform_2, window_bounds = array<i64: 1, 1, 128>}]} {
    %c0 = arith.constant 0 : index
    %c0_0 = arith.constant 0 : index
    %0 = vector.load %arg1[%c0, %c0_0] : memref<1x128xf32, #tpu.memory_space<vmem>>, vector<1x128xf32>
    %cst = arith.constant 1.000000e-01 : f32
    %1 = vector.broadcast %cst : f32 to vector<1x128xf32>
    %2 = arith.mulf %1, %0 : vector<1x128xf32>
    %3 = math.tanh %2 : vector<1x128xf32>
    %4 = tpu.iota {dimensions = array<i32: 1>} : vector<1x128xi32>
    %false = arith.constant false
    %5 = vector.broadcast %false : i1 to vector<1x128xi1>
    %c0_1 = arith.constant 0 : index
    %c0_2 = arith.constant 0 : index
    %6 = vector.load %arg2[%c0_1, %c0_2] : memref<1x8xi32, #tpu.memory_space<vmem>>, vector<1x1xi32>
    %7 = vector.broadcast %6 : vector<1x1xi32> to vector<1x128xi32>
    %8 = arith.cmpi eq, %4, %7 : vector<1x128xi32>
    %9 = arith.ori %5, %8 : vector<1x128xi1>
    %c0_3 = arith.constant 0 : index
    %c1 = arith.constant 1 : index
    %10 = vector.load %arg2[%c0_3, %c1] : memref<1x8xi32, #tpu.memory_space<vmem>>, vector<1x1xi32>
    %11 = vector.broadcast %10 : vector<1x1xi32> to vector<1x128xi32>
    %12 = arith.cmpi eq, %4, %11 : vector<1x128xi32>
    %13 = arith.ori %9, %12 : vector<1x128xi1>
    %c0_4 = arith.constant 0 : index
    %c2 = arith.constant 2 : index
    %14 = vector.load %arg2[%c0_4, %c2] : memref<1x8xi32, #tpu.memory_space<vmem>>, vector<1x1xi32>
    %15 = vector.broadcast %14 : vector<1x1xi32> to vector<1x128xi32>
    %16 = arith.cmpi eq, %4, %15 : vector<1x128xi32>
    %17 = arith.ori %13, %16 : vector<1x128xi1>
    %c0_5 = arith.constant 0 : index
    %c3 = arith.constant 3 : index
    %18 = vector.load %arg2[%c0_5, %c3] : memref<1x8xi32, #tpu.memory_space<vmem>>, vector<1x1xi32>
    %19 = vector.broadcast %18 : vector<1x1xi32> to vector<1x128xi32>
    %20 = arith.cmpi eq, %4, %19 : vector<1x128xi32>
    %21 = arith.ori %17, %20 : vector<1x128xi1>
    %c0_6 = arith.constant 0 : index
    %c4 = arith.constant 4 : index
    %22 = vector.load %arg2[%c0_6, %c4] : memref<1x8xi32, #tpu.memory_space<vmem>>, vector<1x1xi32>
    %23 = vector.broadcast %22 : vector<1x1xi32> to vector<1x128xi32>
    %24 = arith.cmpi eq, %4, %23 : vector<1x128xi32>
    %25 = arith.ori %21, %24 : vector<1x128xi1>
    %c0_7 = arith.constant 0 : index
    %c5 = arith.constant 5 : index
    %26 = vector.load %arg2[%c0_7, %c5] : memref<1x8xi32, #tpu.memory_space<vmem>>, vector<1x1xi32>
    %27 = vector.broadcast %26 : vector<1x1xi32> to vector<1x128xi32>
    %28 = arith.cmpi eq, %4, %27 : vector<1x128xi32>
    %29 = arith.ori %25, %28 : vector<1x128xi1>
    %c0_8 = arith.constant 0 : index
    %c6 = arith.constant 6 : index
    %30 = vector.load %arg2[%c0_8, %c6] : memref<1x8xi32, #tpu.memory_space<vmem>>, vector<1x1xi32>
    %31 = vector.broadcast %30 : vector<1x1xi32> to vector<1x128xi32>
    %32 = arith.cmpi eq, %4, %31 : vector<1x128xi32>
    %33 = arith.ori %29, %32 : vector<1x128xi1>
    %c0_9 = arith.constant 0 : index
    %c7 = arith.constant 7 : index
    %34 = vector.load %arg2[%c0_9, %c7] : memref<1x8xi32, #tpu.memory_space<vmem>>, vector<1x1xi32>
    %35 = vector.broadcast %34 : vector<1x1xi32> to vector<1x128xi32>
    %36 = arith.cmpi eq, %4, %35 : vector<1x128xi32>
    %37 = arith.ori %33, %36 : vector<1x128xi1>
    %cst_10 = arith.constant 1.000000e+00 : f32
    %cst_11 = arith.constant -1.000000e+00 : f32
    %38 = vector.broadcast %cst_10 : f32 to vector<1x128xf32>
    %39 = vector.broadcast %cst_11 : f32 to vector<1x128xf32>
    %40 = arith.select %37, %38, %39 : vector<1x128xi1>, vector<1x128xf32>
    %41 = arith.subf %3, %40 : vector<1x128xf32>
    %42 = math.absf %41 : vector<1x128xf32>
    %cst_12 = arith.constant dense<0.000000e+00> : vector<128xf32>
    %43 = vector.multi_reduction <add>, %42, %cst_12 [0] : vector<1x128xf32> to vector<128xf32>
    %44 = vector.shape_cast %43 : vector<128xf32> to vector<1x128xf32>
    %45 = vector.shape_cast %44 : vector<1x128xf32> to vector<1x1x128xf32>
    %c0_13 = arith.constant 0 : index
    %c0_14 = arith.constant 0 : index
    %c0_15 = arith.constant 0 : index
    %46 = vector.load %arg3[%c0_13, %c0_14, %c0_15] : memref<1x1x128xf32, #tpu.memory_space<vmem>>, vector<1x1x128xf32>
    tpu.vector_store %arg3[%c0_13, %c0_14, %c0_15], %45 {strides = array<i32>} : memref<1x1x128xf32, #tpu.memory_space<vmem>>, vector<1x1x128xf32>,
    return
  }
  func.func @transform_0(%arg0: i32) -> (i32, i32) {
    %c0_i32 = arith.constant 0 : i32
    %c0_i32_0 = arith.constant 0 : i32
    return %arg0, %c0_i32 : i32, i32
  }
  func.func @transform_1(%arg0: i32) -> (i32, i32) {
    %c0_i32 = arith.constant 0 : i32
    %c0_i32_0 = arith.constant 0 : i32
    return %arg0, %c0_i32 : i32, i32
  }
  func.func @transform_2(%arg0: i32) -> (i32, i32, i32) {
    %c0_i32 = arith.constant 0 : i32
    %c0_i32_0 = arith.constant 0 : i32
    %c0_i32_1 = arith.constant 0 : i32
    return %arg0, %c0_i32, %c0_i32_0 : i32, i32, i32
  }
}

</mosaic_0001>

<llo_original>
// kernel: tpu_custom_call.1
$region0: #{tpu_custom_call.1}
  #allocation0 [shape = 'u32[]', space=smem, size = 0x4, offset = 0x4, fixed_abs, tag = 'smem constant byte address 0x4 - core index']
  #allocation1 [shape = 'u32[144,128]{1,0:T(1,128)}', space=vmem, size = 0x12000, scoped, tag = 'internal scratch']
  %s0 = inlined_call_operand.hbm [shape: f32[1,128], index: 0, kind: input, shape index: {}]
  %s1 = inlined_call_operand.vmem [shape: s32[1,8], index: 1, kind: input, shape index: {}]
  %s2 = inlined_call_operand.hbm [shape: f32[1,1,128], index: 2, kind: output, shape index: {}]
  %s3 = sld [smem:[#allocation0]]
  $region22: #{tpu_custom_call.1} parent=0
    _
  %s5 = ssub.s32 1, %s3
  %s6 = scalar_select 0, %s5, %s3
  $region1: #{tpu_custom_call.1} parent=0
    #allocation2 [shape = 'u8[512]{0}', space=vmem, size = 0x400, scoped, tag = 'input window, operand 0, single buffered']
    #allocation3 [shape = 's32[1]{0}', space=sflag, size = 0x4, scoped, tag = 'scoped memory for tpu_custom_call.1']
    #allocation4 [shape = 's32[1]{0}', space=sflag, size = 0x4, scoped, tag = 'scoped memory for tpu_custom_call.1']
    #allocation5 [shape = 'u8[512]{0}', space=vmem, size = 0x400, scoped, tag = 'output window, operand 0, single buffered']
    %7 = vsyncpa [#allocation3], 0
    %8 = vsyncpa [#allocation4], 0
    // Predicated region
    $region2: #{tpu_custom_call.1} parent=1 // pred_check
      _
    $region3: #{tpu_custom_call.1} parent=1 // pred_check_branch
      %10 = sbr.rel (0) target = $region5
    $region4: #{tpu_custom_call.1} parent=1 // pred_region
      %s12 = ssub.s32 16, 16
      %13 = vsyncadd [#allocation3], %s12
      %s15 = sshll.u32 [#allocation2], 4
      %s16 = int_to_ptr.vmem [resolvable:$true] %s15
      %18 = dma.hbm_to_vmem [thread:$0]  %s0, 16, %s16, [#allocation3]
    $region5: #{tpu_custom_call.1} parent=1 // pred_fallthru
      _
    // Predicated region
    $region6: #{tpu_custom_call.1} parent=1 // pred_check
      _
    $region7: #{tpu_custom_call.1} parent=1 // pred_check_branch
      %20 = sbr.rel (0) target = $region9
    $region8: #{tpu_custom_call.1} parent=1 // pred_region
      _
    $region9: #{tpu_custom_call.1} parent=1 // pred_fallthru
      _
    // Predicated region
    $region10: #{tpu_custom_call.1} parent=1 // pred_check
      _
    $region11: #{tpu_custom_call.1} parent=1 // pred_check_branch
      %22 = sbr.rel (0) target = $region13
    $region12: #{tpu_custom_call.1} parent=1 // pred_region
      %23 = dma.done [#allocation3], 16
    $region13: #{tpu_custom_call.1} parent=1 // pred_fallthru
      _
    %v24 = vld [vmem:[#allocation2] sm:$0x1]
    %v25 = vmul.f32 %v24, 0.1
    %v26 = vtanh.pop %v25
    %v27 = vlaneseq
    %v28 = vand.u32 %v27, 127
    %v29 = vld [vmem:[%s1] sm:$0x1]
    %30 = vset.pattern.permute.xlu0 0
    %31 = vperm.xlu0 %30, %v29
    %v32 = vpop.permute.xlu0 %31
    %v33 = vlaneseq
    %v34 = vshrl.u32 %v33, 7
    %v35 = vsub.s32 0, %v34
    %v36 = vrot.slane %v32, %v35
    %vm37 = vcmp.eq.s32.totalorder %v28, %v36
    %38 = vset.pattern.permute.xlu0 1
    %39 = vperm.xlu0 %38, %v29
    %v40 = vpop.permute.xlu0 %39
    %v41 = vlaneseq
    %v42 = vshrl.u32 %v41, 7
    %v43 = vsub.s32 0, %v42
    %v44 = vrot.slane %v40, %v43
    %vm45 = vcmp.eq.s32.totalorder %v28, %v44
    %vm46 = vmor %vm37, %vm45
    %47 = vset.pattern.permute.xlu0 2
    %48 = vperm.xlu0 %47, %v29
    %v49 = vpop.permute.xlu0 %48
    %v50 = vlaneseq
    %v51 = vshrl.u32 %v50, 7
    %v52 = vsub.s32 0, %v51
    %v53 = vrot.slane %v49, %v52
    %vm54 = vcmp.eq.s32.totalorder %v28, %v53
    %vm55 = vmor %vm46, %vm54
    %56 = vset.pattern.permute.xlu0 3
    %57 = vperm.xlu0 %56, %v29
    %v58 = vpop.permute.xlu0 %57
    %v59 = vlaneseq
    %v60 = vshrl.u32 %v59, 7
    %v61 = vsub.s32 0, %v60
    %v62 = vrot.slane %v58, %v61
    %vm63 = vcmp.eq.s32.totalorder %v28, %v62
    %vm64 = vmor %vm55, %vm63
    %65 = vset.pattern.permute.xlu0 4
    %66 = vperm.xlu0 %65, %v29
    %v67 = vpop.permute.xlu0 %66
    %v68 = vlaneseq
    %v69 = vshrl.u32 %v68, 7
    %v70 = vsub.s32 0, %v69
    %v71 = vrot.slane %v67, %v70
    %vm72 = vcmp.eq.s32.totalorder %v28, %v71
    %vm73 = vmor %vm64, %vm72
    %74 = vset.pattern.permute.xlu0 5
    %75 = vperm.xlu0 %74, %v29
    %v76 = vpop.permute.xlu0 %75
    %v77 = vlaneseq
    %v78 = vshrl.u32 %v77, 7
    %v79 = vsub.s32 0, %v78
    %v80 = vrot.slane %v76, %v79
    %vm81 = vcmp.eq.s32.totalorder %v28, %v80
    %vm82 = vmor %vm73, %vm81
    %83 = vset.pattern.permute.xlu0 6
    %84 = vperm.xlu0 %83, %v29
    %v85 = vpop.permute.xlu0 %84
    %v86 = vlaneseq
    %v87 = vshrl.u32 %v86, 7
    %v88 = vsub.s32 0, %v87
    %v89 = vrot.slane %v85, %v88
    %vm90 = vcmp.eq.s32.totalorder %v28, %v89
    %vm91 = vmor %vm82, %vm90
    %92 = vset.pattern.permute.xlu0 7
    %93 = vperm.xlu0 %92, %v29
    %v94 = vpop.permute.xlu0 %93
    %v95 = vlaneseq
    %v96 = vshrl.u32 %v95, 7
    %v97 = vsub.s32 0, %v96
    %v98 = vrot.slane %v94, %v97
    %vm99 = vcmp.eq.s32.totalorder %v28, %v98
    %vm100 = vmor %vm91, %vm99
    %v101 = vsel %vm100, 1.0, -1.0
    %v102 = vsub.f32 %v26, %v101
    %v103 = vand.u32 2147483647, %v102
    %v104 = vadd.f32 %v103, 0.0
    %105 = vst [vmem:[#allocation5] sm:$0x1] %v104
    // Predicated region
    $region14: #{tpu_custom_call.1} parent=1 // pred_check
      _
    $region15: #{tpu_custom_call.1} parent=1 // pred_check_branch
      %107 = sbr.rel (0) target = $region17
    $region16: #{tpu_custom_call.1} parent=1 // pred_region
      %s109 = ssub.s32 16, 16
      %110 = vsyncadd [#allocation4], %s109
      %s112 = sshll.u32 [#allocation5], 4
      %s113 = int_to_ptr.vmem [resolvable:$true] %s112
      %115 = dma.vmem_to_hbm [thread:$0]  %s113, 16, %s2, [#allocation4]
    $region17: #{tpu_custom_call.1} parent=1 // pred_fallthru
      _
    // Predicated region
    $region18: #{tpu_custom_call.1} parent=1 // pred_check
      _
    $region19: #{tpu_custom_call.1} parent=1 // pred_check_branch
      %117 = sbr.rel (0) target = $region21
    $region20: #{tpu_custom_call.1} parent=1 // pred_region
      %118 = dma.done [#allocation4], 16
    $region21: #{tpu_custom_call.1} parent=1 // pred_fallthru
      _
    %119 = vsyncpa [#allocation3], 1
    %120 = vsyncpa [#allocation4], 1

</llo_original>
